<compile_context>
chip_gen: v5e
topology: v5e:2x2
jax: 0.10.0
libtpu: 0.0.40
codegen_flags: <defaults>
</compile_context>

<pallas_src>
import functools

import jax
import jax.numpy as jnp
from jax.experimental import pallas as pl
from jax.experimental.pallas import tpu as pltpu


def _round_up(a, b):
    return (a + b - 1) // b * b


def _prelu(h, alpha_row):
    # per-channel PReLU: max(0,h) + alpha * min(0,h); alpha broadcast over rows
    return jnp.maximum(h, 0.0) + alpha_row * jnp.minimum(h, 0.0)


def _encoder2_kernel(x_ref, ad_ref, w1_ref, b1_ref, a1_ref,
                     w2_ref, b2_ref, a2_ref, y_ref, acc_ref):
    k = pl.program_id(1)

    @pl.when(k == 0)
    def _():
        acc_ref[...] = jnp.zeros_like(acc_ref)

    # Stage 1: h_k = prelu1(x[k_tile] @ W1 + b1)   (K=C_in matmul, recomputed per row tile;
    # costs ~c_in/tile_m of stage 2 and avoids a core-unsafe persistent h cache).
    h = jnp.dot(x_ref[...], w1_ref[...], preferred_element_type=jnp.float32)
    h = _prelu(h + b1_ref[...], a1_ref[...])

    # Stage 2 partial aggregation: acc += AD[i_tile, k_tile] @ h_k.
    # AD is fed to the MXU in its HBM dtype (bf16 fast path / f32 exact path); f32 accumulate.
    acc_ref[...] += jnp.dot(ad_ref[...], h.astype(ad_ref.dtype),
                            preferred_element_type=jnp.float32)

    # Stage 3 (finalize on last reduction tile): y = prelu2(acc @ W2 + b2)
    @pl.when(k == pl.num_programs(1) - 1)
    def _():
        y = jnp.dot(acc_ref[...], w2_ref[...], preferred_element_type=jnp.float32)
        y_ref[...] = _prelu(y + b2_ref[...], a2_ref[...]).astype(y_ref.dtype)


@functools.partial(jax.jit, static_argnames=("tile_m", "tile_k"))
def encoder2_forward(x, ad, w1, b1, a1, w2, b2, a2, *, tile_m=512, tile_k=2048):
    """Fused Pallas implementation of Encoder2.forward.

    x  : [N, C_in]  float32
    ad : [N, N]     dense normalized adjacency; dtype is used as-is
                    (pre-cast to bf16 ONCE outside this call for the fast path)
    w1 : [C_in, H]  (= torch W1.T), b1/a1 : [1, H]
    w2 : [H, H]     (= torch W2.T), b2/a2 : [1, H]
    """
    n, c_in = x.shape
    h_dim = w1.shape[1]
    h_lanes = _round_up(h_dim, 128)          # lane-dense hidden dim end-to-end

    # ---- tile selection (arbitrary N supported; v7x megacore kept fed) ----
    n_align = _round_up(n, 128)
    tk = min(tile_k, n_align)                # reduction tile (AD cols / h rows), %128
    tm = min(tile_m, n_align)                # output row tile, %128
    # keep >= 2 row tiles when possible so the "parallel" axis splits across v7x's 2 TCs
    if tm == n_align and n_align >= 256:
        tm = _round_up(n_align // 2, 128)
    assert tm % 8 == 0 and tk % 128 == 0

    n_pad_m = _round_up(n, tm)               # AD rows / output rows
    n_pad_k = _round_up(n, tk)               # AD cols / x rows

    # Padding correctness note: padded x rows give h = prelu1(b1) which may be nonzero,
    # but the matching padded AD *columns* are zero so they contribute nothing; padded AD
    # rows produce garbage output rows that are sliced off below.  Padded hidden channels
    # stay exactly zero because the padded weight/bias columns are zero.
    if n_pad_k != n:
        x = jnp.pad(x, ((0, n_pad_k - n), (0, 0)))
    if n_pad_m != n or n_pad_k != n:
        ad = jnp.pad(ad, ((0, n_pad_m - n), (0, n_pad_k - n)))
    if h_lanes != h_dim:
        hp = h_lanes - h_dim
        w1 = jnp.pad(w1, ((0, 0), (0, hp)))
        w2 = jnp.pad(w2, ((0, hp), (0, hp)))
        b1 = jnp.pad(b1, ((0, 0), (0, hp)))
        b2 = jnp.pad(b2, ((0, 0), (0, hp)))
        a1 = jnp.pad(a1, ((0, 0), (0, hp)))
        a2 = jnp.pad(a2, ((0, 0), (0, hp)))

    grid = (n_pad_m // tm, n_pad_k // tk)
    n_i, n_k = grid
    ad_bpe = jnp.dtype(ad.dtype).itemsize

    # ---- VMEM budget (double-buffered tiles + accumulator + params), 40 MiB cap for v7x ----
    tile_bytes = (2 * tm * tk * ad_bpe              # AD tile (double-buffered)
                  + 2 * tk * c_in * 4               # x tile  (double-buffered)
                  + 2 * tm * h_lanes * 4            # y tile  (double-buffered)
                  + tm * h_lanes * 4                # f32 accumulator scratch
                  + 2 * (c_in + h_lanes + 4) * h_lanes * 4)   # W1/W2/biases/alphas
    vmem_limit = int(min(40 << 20, max(8 << 20, 2 * tile_bytes)))

    # ---- advisory cost estimate (includes output write) ----
    flops = int(2 * n_i * n_pad_k * c_in * h_lanes        # stage 1 (recomputed per row tile)
                + 2 * n_pad_m * n_pad_k * h_lanes         # AD @ h
                + 2 * n_pad_m * h_lanes * h_lanes)        # @ W2
    bytes_accessed = int(n_pad_m * n_pad_k * ad_bpe
                         + n_i * n_pad_k * c_in * 4
                         + n_pad_m * h_lanes * 4
                         + (c_in * h_lanes + h_lanes * h_lanes + 4 * h_lanes) * 4)

    y = pl.pallas_call(
        _encoder2_kernel,
        out_shape=jax.ShapeDtypeStruct((n_pad_m, h_lanes), jnp.float32),
        grid=grid,
        in_specs=[
            pl.BlockSpec((tk, c_in), lambda i, k: (k, 0)),          # x k-tile (rows of h_k)
            pl.BlockSpec((tm, tk), lambda i, k: (i, k)),            # AD (row tile, K tile)
            pl.BlockSpec((c_in, h_lanes), lambda i, k: (0, 0)),     # W1^T (grid-invariant)
            pl.BlockSpec((1, h_lanes), lambda i, k: (0, 0)),        # bias1
            pl.BlockSpec((1, h_lanes), lambda i, k: (0, 0)),        # alpha1
            pl.BlockSpec((h_lanes, h_lanes), lambda i, k: (0, 0)),  # W2^T
            pl.BlockSpec((1, h_lanes), lambda i, k: (0, 0)),        # bias2
            pl.BlockSpec((1, h_lanes), lambda i, k: (0, 0)),        # alpha2
        ],
        out_specs=pl.BlockSpec((tm, h_lanes), lambda i, k: (i, 0)),
        scratch_shapes=[pltpu.VMEM((tm, h_lanes), jnp.float32)],    # f32 accumulator
        compiler_params=pltpu.CompilerParams(
            dimension_semantics=("parallel", "arbitrary"),
            vmem_limit_bytes=vmem_limit),
        cost_estimate=pl.CostEstimate(
            flops=flops, transcendentals=0, bytes_accessed=bytes_accessed),
    )(x, ad, w1, b1, a1, w2, b2, a2)

    return y[:n, :h_dim]


# ---------------------------------------------------------------------------
# Pure-JAX reference for correctness
# ---------------------------------------------------------------------------
def encoder2_ref(x, ad, w1, b1, a1, w2, b2, a2):
    h = x @ w1 + b1
    h = jnp.maximum(h, 0.0) + a1 * jnp.minimum(h, 0.0)
    h = ad @ h
    y = h @ w2 + b2
    y = jnp.maximum(y, 0.0) + a2 * jnp.minimum(y, 0.0)
    return y


def _make_adjacency(key, n):
    mask = (jax.random.uniform(key, (n, n)) < 0.05).astype(jnp.float32)
    mask = mask + jnp.eye(n, dtype=jnp.float32)
    return mask / jnp.sum(mask, axis=1, keepdims=True)


if __name__ == "__main__":
    # Small deterministic problem: N=128 nodes, in_channels=16, hidden_channels=32.
    N, C_IN, HID = 128, 16, 32
    key = jax.random.PRNGKey(0)
    k_x, k_ad, k_w1, k_w2 = jax.random.split(key, 4)

    x = jax.random.normal(k_x, (N, C_IN), dtype=jnp.float32)
    ad = _make_adjacency(k_ad, N)

    # Parameters (torch Linear weight is [out, in]; kernel uses transposed [in, out]).
    bound1 = 1.0 / (C_IN ** 0.5)
    bound2 = 1.0 / (HID ** 0.5)
    w1 = jax.random.uniform(k_w1, (HID, C_IN), minval=-bound1, maxval=bound1,
                            dtype=jnp.float32).T                 # [C_IN, HID]
    w2 = jax.random.uniform(k_w2, (HID, HID), minval=-bound2, maxval=bound2,
                            dtype=jnp.float32).T                 # [HID, HID]
    b1 = jnp.zeros((1, HID), dtype=jnp.float32)                  # torch: zeros
    b2 = jnp.zeros((1, HID), dtype=jnp.float32)
    a1 = jnp.full((1, HID), 0.25, dtype=jnp.float32)             # PReLU default init
    a2 = jnp.full((1, HID), 0.25, dtype=jnp.float32)

    # Fast path: AD pre-cast to bf16 ONCE, outside the jitted hot path (no wrapper cast pass).
    ad_bf16 = jax.block_until_ready(ad.astype(jnp.bfloat16))
    y = jax.block_until_ready(encoder2_forward(x, ad_bf16, w1, b1, a1, w2, b2, a2))
    y_ref = encoder2_ref(x, ad, w1, b1, a1, w2, b2, a2)
    assert y.shape == (N, HID)
    assert jnp.allclose(y, y_ref, atol=2e-2, rtol=2e-2), "bf16 path mismatch vs reference"

    # Exact f32 path with N not a multiple of the tile sizes (exercises padding + 2 row tiles).
    N2 = 200
    x2 = jax.random.normal(jax.random.PRNGKey(1), (N2, C_IN), dtype=jnp.float32)
    ad2 = _make_adjacency(jax.random.PRNGKey(2), N2)
    y2 = jax.block_until_ready(encoder2_forward(x2, ad2, w1, b1, a1, w2, b2, a2))
    y2_ref = encoder2_ref(x2, ad2, w1, b1, a1, w2, b2, a2)
    assert y2.shape == (N2, HID)
    assert jnp.allclose(y2, y2_ref, atol=1e-4, rtol=1e-4), "f32 path mismatch vs reference"

    print("KERNEL_OK")
</pallas_src>

<mosaic_0001>
module attributes {stable_mosaic.version = 11 : i64} {
  func.func @_encoder2_kernel(%arg0: i32, %arg1: i32, %arg2: memref<128x16xf32, #tpu.memory_space<vmem>>, %arg3: memref<128x128xbf16, #tpu.memory_space<vmem>>, %arg4: memref<16x128xf32, #tpu.memory_space<vmem>>, %arg5: memref<1x128xf32, #tpu.memory_space<vmem>>, %arg6: memref<1x128xf32, #tpu.memory_space<vmem>>, %arg7: memref<128x128xf32, #tpu.memory_space<vmem>>, %arg8: memref<1x128xf32, #tpu.memory_space<vmem>>, %arg9: memref<1x128xf32, #tpu.memory_space<vmem>>, %arg10: memref<128x128xf32, #tpu.memory_space<vmem>>, %arg11: memref<128x128xf32, #tpu.memory_space<vmem>>) attributes {dimension_semantics = [#tpu.dimension_semantics<parallel>, #tpu.dimension_semantics<arbitrary>], iteration_bounds = array<i64: 1, 1>, scalar_prefetch = 0 : i64, scratch_operands = 1 : i64, tpu.core_type = #tpu.core_type<tc>, window_params = [{transform_indices = @transform_0, window_bounds = array<i64: 128, 16>}, {transform_indices = @transform_1, window_bounds = array<i64: 128, 128>}, {pipeline_mode = #tpu.pipeline_mode<synchronous>, transform_indices = @transform_2, window_bounds = array<i64: 16, 128>}, {pipeline_mode = #tpu.pipeline_mode<synchronous>, transform_indices = @transform_3, window_bounds = array<i64: 1, 128>}, {pipeline_mode = #tpu.pipeline_mode<synchronous>, transform_indices = @transform_4, window_bounds = array<i64: 1, 128>}, {pipeline_mode = #tpu.pipeline_mode<synchronous>, transform_indices = @transform_5, window_bounds = array<i64: 128, 128>}, {pipeline_mode = #tpu.pipeline_mode<synchronous>, transform_indices = @transform_6, window_bounds = array<i64: 1, 128>}, {pipeline_mode = #tpu.pipeline_mode<synchronous>, transform_indices = @transform_7, window_bounds = array<i64: 1, 128>}, {transform_indices = @transform_8, window_bounds = array<i64: 128, 128>}]} {
    %c0_i32 = arith.constant 0 : i32
    %0 = arith.cmpi eq, %arg1, %c0_i32 : i32
    %1 = arith.extui %0 : i1 to i32
    %c0_i32_0 = arith.constant 0 : i32
    %2 = arith.cmpi ne, %1, %c0_i32_0 : i32
    scf.if %2 {
      %cst_19 = arith.constant 0.000000e+00 : f32
      %26 = vector.broadcast %cst_19 : f32 to vector<128x128xf32>
      %c0_20 = arith.constant 0 : index
      %c0_21 = arith.constant 0 : index
      %27 = vector.load %arg11[%c0_20, %c0_21] : memref<128x128xf32, #tpu.memory_space<vmem>>, vector<128x128xf32>
      tpu.vector_store %arg11[%c0_20, %c0_21], %26 {strides = array<i32>} : memref<128x128xf32, #tpu.memory_space<vmem>>, vector<128x128xf32>,
    } else {
    }
    %c0 = arith.constant 0 : index
    %c0_1 = arith.constant 0 : index
    %3 = vector.load %arg2[%c0, %c0_1] : memref<128x16xf32, #tpu.memory_space<vmem>>, vector<128x16xf32>
    %c0_2 = arith.constant 0 : index
    %c0_3 = arith.constant 0 : index
    %4 = vector.load %arg4[%c0_2, %c0_3] : memref<16x128xf32, #tpu.memory_space<vmem>>, vector<16x128xf32>
    %cst = arith.constant dense<0.000000e+00> : vector<128x128xf32>
    %5 = tpu.matmul %3, %4, %cst {dimension_numbers = #tpu.dot_dimension_numbers<[1], [0], [0], [1], [0, 0, 1, 1], [], []>} : vector<128x16xf32>, vector<16x128xf32>, vector<128x128xf32> -> vector<128x128xf32>
    %c0_4 = arith.constant 0 : index
    %c0_5 = arith.constant 0 : index
    %6 = vector.load %arg5[%c0_4, %c0_5] : memref<1x128xf32, #tpu.memory_space<vmem>>, vector<1x128xf32>
    %7 = vector.broadcast %6 : vector<1x128xf32> to vector<128x128xf32>
    %8 = arith.addf %5, %7 : vector<128x128xf32>
    %c0_6 = arith.constant 0 : index
    %c0_7 = arith.constant 0 : index
    %9 = vector.load %arg6[%c0_6, %c0_7] : memref<1x128xf32, #tpu.memory_space<vmem>>, vector<1x128xf32>
    %cst_8 = arith.constant 0.000000e+00 : f32
    %10 = vector.broadcast %cst_8 : f32 to vector<128x128xf32>
    %11 = arith.maximumf %8, %10 : vector<128x128xf32>
    %cst_9 = arith.constant 0.000000e+00 : f32
    %12 = vector.broadcast %cst_9 : f32 to vector<128x128xf32>
    %13 = arith.minimumf %8, %12 : vector<128x128xf32>
    %14 = vector.broadcast %9 : vector<1x128xf32> to vector<128x128xf32>
    %15 = arith.mulf %14, %13 : vector<128x128xf32>
    %16 = arith.addf %11, %15 : vector<128x128xf32>
    %c0_10 = arith.constant 0 : index
    %c0_11 = arith.constant 0 : index
    %17 = vector.load %arg11[%c0_10, %c0_11] : memref<128x128xf32, #tpu.memory_space<vmem>>, vector<128x128xf32>
    %c0_12 = arith.constant 0 : index
    %c0_13 = arith.constant 0 : index
    %18 = vector.load %arg3[%c0_12, %c0_13] : memref<128x128xbf16, #tpu.memory_space<vmem>>, vector<128x128xbf16>
    %19 = arith.truncf %16 : vector<128x128xf32> to vector<128x128xbf16>
    %cst_14 = arith.constant dense<0.000000e+00> : vector<128x128xf32>
    %20 = tpu.matmul %18, %19, %cst_14 {dimension_numbers = #tpu.dot_dimension_numbers<[1], [0], [0], [1], [0, 0, 1, 1], [], []>} : vector<128x128xbf16>, vector<128x128xbf16>, vector<128x128xf32> -> vector<128x128xf32>
    %21 = arith.addf %17, %20 : vector<128x128xf32>
    %c0_15 = arith.constant 0 : index
    %c0_16 = arith.constant 0 : index
    %22 = vector.load %arg11[%c0_15, %c0_16] : memref<128x128xf32, #tpu.memory_space<vmem>>, vector<128x128xf32>
    tpu.vector_store %arg11[%c0_15, %c0_16], %21 {strides = array<i32>} : memref<128x128xf32, #tpu.memory_space<vmem>>, vector<128x128xf32>,
    %c0_i32_17 = arith.constant 0 : i32
    %23 = arith.cmpi eq, %arg1, %c0_i32_17 : i32
    %24 = arith.extui %23 : i1 to i32
    %c0_i32_18 = arith.constant 0 : i32
    %25 = arith.cmpi ne, %24, %c0_i32_18 : i32
    scf.if %25 {
      %c0_19 = arith.constant 0 : index
      %c0_20 = arith.constant 0 : index
      %26 = vector.load %arg11[%c0_19, %c0_20] : memref<128x128xf32, #tpu.memory_space<vmem>>, vector<128x128xf32>
      %c0_21 = arith.constant 0 : index
      %c0_22 = arith.constant 0 : index
      %27 = vector.load %arg7[%c0_21, %c0_22] : memref<128x128xf32, #tpu.memory_space<vmem>>, vector<128x128xf32>
      %cst_23 = arith.constant dense<0.000000e+00> : vector<128x128xf32>
      %28 = tpu.matmul %26, %27, %cst_23 {dimension_numbers = #tpu.dot_dimension_numbers<[1], [0], [0], [1], [0, 0, 1, 1], [], []>} : vector<128x128xf32>, vector<128x128xf32>, vector<128x128xf32> -> vector<128x128xf32>
      %c0_24 = arith.constant 0 : index
      %c0_25 = arith.constant 0 : index
      %29 = vector.load %arg8[%c0_24, %c0_25] : memref<1x128xf32, #tpu.memory_space<vmem>>, vector<1x128xf32>
      %30 = vector.broadcast %29 : vector<1x128xf32> to vector<128x128xf32>
      %31 = arith.addf %28, %30 : vector<128x128xf32>
      %c0_26 = arith.constant 0 : index
      %c0_27 = arith.constant 0 : index
      %32 = vector.load %arg9[%c0_26, %c0_27] : memref<1x128xf32, #tpu.memory_space<vmem>>, vector<1x128xf32>
      %cst_28 = arith.constant 0.000000e+00 : f32
      %33 = vector.broadcast %cst_28 : f32 to vector<128x128xf32>
      %34 = arith.maximumf %31, %33 : vector<128x128xf32>
      %cst_29 = arith.constant 0.000000e+00 : f32
      %35 = vector.broadcast %cst_29 : f32 to vector<128x128xf32>
      %36 = arith.minimumf %31, %35 : vector<128x128xf32>
      %37 = vector.broadcast %32 : vector<1x128xf32> to vector<128x128xf32>
      %38 = arith.mulf %37, %36 : vector<128x128xf32>
      %39 = arith.addf %34, %38 : vector<128x128xf32>
      %c0_30 = arith.constant 0 : index
      %c0_31 = arith.constant 0 : index
      %40 = vector.load %arg10[%c0_30, %c0_31] : memref<128x128xf32, #tpu.memory_space<vmem>>, vector<128x128xf32>
      tpu.vector_store %arg10[%c0_30, %c0_31], %39 {strides = array<i32>} : memref<128x128xf32, #tpu.memory_space<vmem>>, vector<128x128xf32>,
    } else {
    }
    return
  }
  func.func @transform_0(%arg0: i32, %arg1: i32) -> (i32, i32) {
    %c0_i32 = arith.constant 0 : i32
    %c0_i32_0 = arith.constant 0 : i32
    return %arg1, %c0_i32 : i32, i32
  }
  func.func @transform_1(%arg0: i32, %arg1: i32) -> (i32, i32) {
    %c0_i32 = arith.constant 0 : i32
    return %arg0, %arg1 : i32, i32
  }
  func.func @transform_2(%arg0: i32, %arg1: i32) -> (i32, i32) {
    %c0_i32 = arith.constant 0 : i32
    %c0_i32_0 = arith.constant 0 : i32
    %c0_i32_1 = arith.constant 0 : i32
    return %c0_i32, %c0_i32_0 : i32, i32
  }
  func.func @transform_3(%arg0: i32, %arg1: i32) -> (i32, i32) {
    %c0_i32 = arith.constant 0 : i32
    %c0_i32_0 = arith.constant 0 : i32
    %c0_i32_1 = arith.constant 0 : i32
    return %c0_i32, %c0_i32_0 : i32, i32
  }
  func.func @transform_4(%arg0: i32, %arg1: i32) -> (i32, i32) {
    %c0_i32 = arith.constant 0 : i32
    %c0_i32_0 = arith.constant 0 : i32
    %c0_i32_1 = arith.constant 0 : i32
    return %c0_i32, %c0_i32_0 : i32, i32
  }
  func.func @transform_5(%arg0: i32, %arg1: i32) -> (i32, i32) {
    %c0_i32 = arith.constant 0 : i32
    %c0_i32_0 = arith.constant 0 : i32
    %c0_i32_1 = arith.constant 0 : i32
    return %c0_i32, %c0_i32_0 : i32, i32
  }
  func.func @transform_6(%arg0: i32, %arg1: i32) -> (i32, i32) {
    %c0_i32 = arith.constant 0 : i32
    %c0_i32_0 = arith.constant 0 : i32
    %c0_i32_1 = arith.constant 0 : i32
    return %c0_i32, %c0_i32_0 : i32, i32
  }
  func.func @transform_7(%arg0: i32, %arg1: i32) -> (i32, i32) {
    %c0_i32 = arith.constant 0 : i32
    %c0_i32_0 = arith.constant 0 : i32
    %c0_i32_1 = arith.constant 0 : i32
    return %c0_i32, %c0_i32_0 : i32, i32
  }
  func.func @transform_8(%arg0: i32, %arg1: i32) -> (i32, i32) {
    %c0_i32 = arith.constant 0 : i32
    %c0_i32_0 = arith.constant 0 : i32
    return %arg0, %c0_i32 : i32, i32
  }
}

</mosaic_0001>

<llo_original>
// kernel: encoder2_forward.1
$region0: #{encoder2_forward.1}
  #allocation0 [shape = 'u32[]', space=smem, size = 0x4, offset = 0x4, fixed_abs, tag = 'smem constant byte address 0x4 - core index']
  #allocation1 [shape = 'u32[72,128]{1,0:T(1,128)}', space=vmem, size = 0x9000, scoped, tag = 'internal scratch']
  #allocation2 [shape = 'f32[128,128]{1,0:T(8,128)}', space=vmem, size = 0x10000, scoped, tag = 'scratch operand']
  %s0 = inlined_call_operand.vmem [shape: f32[128,16], index: 0, kind: input, shape index: {}]
  %s1 = inlined_call_operand.vmem [shape: bf16[128,128], index: 1, kind: input, shape index: {}]
  %s2 = inlined_call_operand.vmem [shape: f32[16,128], index: 2, kind: input, shape index: {}]
  %s3 = inlined_call_operand.vmem [shape: f32[1,128], index: 3, kind: input, shape index: {}]
  %s4 = inlined_call_operand.vmem [shape: f32[1,128], index: 4, kind: input, shape index: {}]
  %s5 = inlined_call_operand.vmem [shape: f32[128,128], index: 5, kind: input, shape index: {}]
  %s6 = inlined_call_operand.vmem [shape: f32[1,128], index: 6, kind: input, shape index: {}]
  %s7 = inlined_call_operand.vmem [shape: f32[1,128], index: 7, kind: input, shape index: {}]
  %s8 = inlined_call_operand.vmem [shape: f32[128,128], index: 8, kind: output, shape index: {}]
  %s9 = sld [smem:[#allocation0]]
  $region50: #{encoder2_forward.1} parent=0
    _
  %s11 = ssub.s32 1, %s9
  %s12 = scalar_select 0, %s11, %s9
  // Predicated region
  $region2: #{encoder2_forward.1} parent=0 // pred_check
    _
  $region3: #{encoder2_forward.1} parent=0 // pred_check_branch
    %14 = sbr.rel (0) target = $region5
  $region4: #{encoder2_forward.1} parent=0 // pred_region
    _
  $region5: #{encoder2_forward.1} parent=0 // pred_fallthru
    _
  // Predicated region
  $region6: #{encoder2_forward.1} parent=0 // pred_check
    _
  $region7: #{encoder2_forward.1} parent=0 // pred_check_branch
    %16 = sbr.rel (0) target = $region9
  $region8: #{encoder2_forward.1} parent=0 // pred_region
    _
  $region9: #{encoder2_forward.1} parent=0 // pred_fallthru
    _
  // Predicated region
  $region10: #{encoder2_forward.1} parent=0 // pred_check
    _
  $region11: #{encoder2_forward.1} parent=0 // pred_check_branch
    %18 = sbr.rel (0) target = $region13
  $region12: #{encoder2_forward.1} parent=0 // pred_region
    _
  $region13: #{encoder2_forward.1} parent=0 // pred_fallthru
    _
  // Predicated region
  $region14: #{encoder2_forward.1} parent=0 // pred_check
    _
  $region15: #{encoder2_forward.1} parent=0 // pred_check_branch
    %20 = sbr.rel (0) target = $region17
  $region16: #{encoder2_forward.1} parent=0 // pred_region
    _
  $region17: #{encoder2_forward.1} parent=0 // pred_fallthru
    _
  // Predicated region
  $region18: #{encoder2_forward.1} parent=0 // pred_check
    _
  $region19: #{encoder2_forward.1} parent=0 // pred_check_branch
    %22 = sbr.rel (0) target = $region21
  $region20: #{encoder2_forward.1} parent=0 // pred_region
    _
  $region21: #{encoder2_forward.1} parent=0 // pred_fallthru
    _
  // Predicated region
  $region22: #{encoder2_forward.1} parent=0 // pred_check
    _
  $region23: #{encoder2_forward.1} parent=0 // pred_check_branch
    %24 = sbr.rel (0) target = $region25
  $region24: #{encoder2_forward.1} parent=0 // pred_region
    _
  $region25: #{encoder2_forward.1} parent=0 // pred_fallthru
    _
  // Predicated region
  $region26: #{encoder2_forward.1} parent=0 // pred_check
    _
  $region27: #{encoder2_forward.1} parent=0 // pred_check_branch
    %26 = sbr.rel (0) target = $region29
  $region28: #{encoder2_forward.1} parent=0 // pred_region
    _
  $region29: #{encoder2_forward.1} parent=0 // pred_fallthru
    _
  // Predicated region
  $region30: #{encoder2_forward.1} parent=0 // pred_check
    _
  $region31: #{encoder2_forward.1} parent=0 // pred_check_branch
    %28 = sbr.rel (0) target = $region33
  $region32: #{encoder2_forward.1} parent=0 // pred_region
    _
  $region33: #{encoder2_forward.1} parent=0 // pred_fallthru
    _
  %p29 = scmp.eq.s32.totalorder 0, 0
  // Predicated region
  $region34: #{encoder2_forward.1} parent=0 // pred_check
    %p30 = pneg %p29
  $region35: #{encoder2_forward.1} parent=0 // pred_check_branch
    %32 = sbr.rel (%p30) target = $region37
  $region36: #{encoder2_forward.1} parent=0 // pred_region
    %33 = vst [vmem:[#allocation2] sm:$0xff] 0.0
    %34 = vst [vmem:[#allocation2 + $0x8] sm:$0xff] 0.0
    %35 = vst [vmem:[#allocation2 + $0x10] sm:$0xff] 0.0
    %36 = vst [vmem:[#allocation2 + $0x18] sm:$0xff] 0.0
    %37 = vst [vmem:[#allocation2 + $0x20] sm:$0xff] 0.0
    %38 = vst [vmem:[#allocation2 + $0x28] sm:$0xff] 0.0
    %39 = vst [vmem:[#allocation2 + $0x30] sm:$0xff] 0.0
    %40 = vst [vmem:[#allocation2 + $0x38] sm:$0xff] 0.0
    %41 = vst [vmem:[#allocation2 + $0x40] sm:$0xff] 0.0
    %42 = vst [vmem:[#allocation2 + $0x48] sm:$0xff] 0.0
    %43 = vst [vmem:[#allocation2 + $0x50] sm:$0xff] 0.0
    %44 = vst [vmem:[#allocation2 + $0x58] sm:$0xff] 0.0
    %45 = vst [vmem:[#allocation2 + $0x60] sm:$0xff] 0.0
    %46 = vst [vmem:[#allocation2 + $0x68] sm:$0xff] 0.0
    %47 = vst [vmem:[#allocation2 + $0x70] sm:$0xff] 0.0
    %48 = vst [vmem:[#allocation2 + $0x78] sm:$0xff] 0.0
  $region37: #{encoder2_forward.1} parent=0 // pred_fallthru
    _
  %v49 = vld [vmem:[%s0] sm:$0xff]
  %v50 = vld [vmem:[%s0 + $0x8] sm:$0xff]
  %v51 = vld [vmem:[%s0 + $0x10] sm:$0xff]
  %v52 = vld [vmem:[%s0 + $0x18] sm:$0xff]
  %v53 = vld [vmem:[%s0 + $0x20] sm:$0xff]
  %v54 = vld [vmem:[%s0 + $0x28] sm:$0xff]
  %v55 = vld [vmem:[%s0 + $0x30] sm:$0xff]
  %v56 = vld [vmem:[%s0 + $0x38] sm:$0xff]
  %v57 = vld [vmem:[%s0 + $0x40] sm:$0xff]
  %v58 = vld [vmem:[%s0 + $0x48] sm:$0xff]
  %v59 = vld [vmem:[%s0 + $0x50] sm:$0xff]
  %v60 = vld [vmem:[%s0 + $0x58] sm:$0xff]
  %v61 = vld [vmem:[%s0 + $0x60] sm:$0xff]
  %v62 = vld [vmem:[%s0 + $0x68] sm:$0xff]
  %v63 = vld [vmem:[%s0 + $0x70] sm:$0xff]
  %v64 = vld [vmem:[%s0 + $0x78] sm:$0xff]
  %v65 = vld [vmem:[%s2] sm:$0xff]
  %v66 = vld [vmem:[%s2 + $0x8] sm:$0xff]
  %v67 = vld [vmem:[%s3] sm:$0x1]
  %v69 = vperm.slane %v67, 0
  %vm71 = vcmask 130048
  %v73 = vsel %vm71, %v49, 0
  %v76 = vsel %vm71, %v50, 0
  %v79 = vsel %vm71, %v51, 0
  %v82 = vsel %vm71, %v52, 0
  %v85 = vsel %vm71, %v53, 0
  %v88 = vsel %vm71, %v54, 0
  %v91 = vsel %vm71, %v55, 0
  %v94 = vsel %vm71, %v56, 0
  %v97 = vsel %vm71, %v57, 0
  %v100 = vsel %vm71, %v58, 0
  %v103 = vsel %vm71, %v59, 0
  %v106 = vsel %vm71, %v60, 0
  %v109 = vsel %vm71, %v61, 0
  %v112 = vsel %vm71, %v62, 0
  %v115 = vsel %vm71, %v63, 0
  %v118 = vsel %vm71, %v64, 0
  %120 = vmatpush.msra.mxu0 0.0
  %121 = vmatpush.msra.mxu0 0.0
  %122 = vmatpush.msra.mxu0 0.0
  %123 = vmatpush.msra.mxu0 0.0
  %124 = vmatpush.msra.mxu0 0.0
  %125 = vmatpush.msra.mxu0 0.0
  %126 = vmatpush.msra.mxu0 0.0
  %127 = vmatpush.msra.mxu0 0.0
  %128 = vmatpush.msra.mxu0 0.0
  %129 = vmatpush.msra.mxu0 0.0
  %130 = vmatpush.msra.mxu0 0.0
  %131 = vmatpush.msra.mxu0 0.0
  %132 = vmatpush.msra.mxu0 0.0
  %133 = vmatpush.msra.mxu0 0.0
  %134 = vmatpush.msra.mxu0 %v66
  %135 = vmatpush.msra.mxu0 %v65
  %136 = vmatmul.f32.gmra.mxu0 %v73
  %v137 = vpop.f32.mrf.mxu0
  %v138 = vadd.f32 %v69, %v137
  %139 = vmatmul.f32.gmra.mxu0 %v76
  %v140 = vpop.f32.mrf.mxu0
  %v141 = vadd.f32 %v69, %v140
  %142 = vmatmul.f32.gmra.mxu0 %v79
  %v143 = vpop.f32.mrf.mxu0
  %v144 = vadd.f32 %v69, %v143
  %145 = vmatmul.f32.gmra.mxu0 %v82
  %v146 = vpop.f32.mrf.mxu0
  %v147 = vadd.f32 %v69, %v146
  %148 = vmatmul.f32.gmra.mxu0 %v85
  %v149 = vpop.f32.mrf.mxu0
  %v150 = vadd.f32 %v69, %v149
  %151 = vmatmul.f32.gmra.mxu0 %v88
  %v152 = vpop.f32.mrf.mxu0
  %v153 = vadd.f32 %v69, %v152
  %154 = vmatmul.f32.gmra.mxu0 %v91
  %v155 = vpop.f32.mrf.mxu0
  %v156 = vadd.f32 %v69, %v155
  %157 = vmatmul.f32.gmra.mxu0 %v94
  %v158 = vpop.f32.mrf.mxu0
  %v159 = vadd.f32 %v69, %v158
  %160 = vmatmul.f32.gmra.mxu0 %v97
  %v161 = vpop.f32.mrf.mxu0
  %v162 = vadd.f32 %v69, %v161
  %163 = vmatmul.f32.gmra.mxu0 %v100
  %v164 = vpop.f32.mrf.mxu0
  %v165 = vadd.f32 %v69, %v164
  %166 = vmatmul.f32.gmra.mxu0 %v103
  %v167 = vpop.f32.mrf.mxu0
  %v168 = vadd.f32 %v69, %v167
  %169 = vmatmul.f32.gmra.mxu0 %v106
  %v170 = vpop.f32.mrf.mxu0
  %v171 = vadd.f32 %v69, %v170
  %172 = vmatmul.f32.gmra.mxu0 %v109
  %v173 = vpop.f32.mrf.mxu0
  %v174 = vadd.f32 %v69, %v173
  %175 = vmatmul.f32.gmra.mxu0 %v112
  %v176 = vpop.f32.mrf.mxu0
  %v177 = vadd.f32 %v69, %v176
  %178 = vmatmul.f32.gmra.mxu0 %v115
  %v179 = vpop.f32.mrf.mxu0
  %v180 = vadd.f32 %v69, %v179
  %181 = vmatmul.f32.gmra.mxu0 %v118
  %v182 = vpop.f32.mrf.mxu0
  %v183 = vadd.f32 %v69, %v182
  %184 = vdwg.mxu0
  %v185 = vld [vmem:[%s4] sm:$0x1]
  %v186 = vmax.f32 %v138, 0.0
  %v187 = vmax.f32 %v141, 0.0
  %v188 = vmax.f32 %v144, 0.0
  %v189 = vmax.f32 %v147, 0.0
  %v190 = vmax.f32 %v150, 0.0
  %v191 = vmax.f32 %v153, 0.0
  %v192 = vmax.f32 %v156, 0.0
  %v193 = vmax.f32 %v159, 0.0
  %v194 = vmax.f32 %v162, 0.0
  %v195 = vmax.f32 %v165, 0.0
  %v196 = vmax.f32 %v168, 0.0
  %v197 = vmax.f32 %v171, 0.0
  %v198 = vmax.f32 %v174, 0.0
  %v199 = vmax.f32 %v177, 0.0
  %v200 = vmax.f32 %v180, 0.0
  %v201 = vmax.f32 %v183, 0.0
  %v202 = vmin.f32 %v138, 0.0
  %v203 = vmin.f32 %v141, 0.0
  %v204 = vmin.f32 %v144, 0.0
  %v205 = vmin.f32 %v147, 0.0
  %v206 = vmin.f32 %v150, 0.0
  %v207 = vmin.f32 %v153, 0.0
  %v208 = vmin.f32 %v156, 0.0
  %v209 = vmin.f32 %v159, 0.0
  %v210 = vmin.f32 %v162, 0.0
  %v211 = vmin.f32 %v165, 0.0
  %v212 = vmin.f32 %v168, 0.0
  %v213 = vmin.f32 %v171, 0.0
  %v214 = vmin.f32 %v174, 0.0
  %v215 = vmin.f32 %v177, 0.0
  %v216 = vmin.f32 %v180, 0.0
  %v217 = vmin.f32 %v183, 0.0
  %v219 = vperm.slane %v185, 0
  %v221 = vmul.f32 %v219, %v202
  %v222 = vmul.f32 %v219, %v203
  %v223 = vmul.f32 %v219, %v204
  %v224 = vmul.f32 %v219, %v205
  %v225 = vmul.f32 %v219, %v206
  %v226 = vmul.f32 %v219, %v207
  %v227 = vmul.f32 %v219, %v208
  %v228 = vmul.f32 %v219, %v209
  %v229 = vmul.f32 %v219, %v210
  %v230 = vmul.f32 %v219, %v211
  %v231 = vmul.f32 %v219, %v212
  %v232 = vmul.f32 %v219, %v213
  %v233 = vmul.f32 %v219, %v214
  %v234 = vmul.f32 %v219, %v215
  %v235 = vmul.f32 %v219, %v216
  %v236 = vmul.f32 %v219, %v217
  %v237 = vadd.f32 %v186, %v221
  %v238 = vadd.f32 %v187, %v222
  %v239 = vadd.f32 %v188, %v223
  %v240 = vadd.f32 %v189, %v224
  %v241 = vadd.f32 %v190, %v225
  %v242 = vadd.f32 %v191, %v226
  %v243 = vadd.f32 %v192, %v227
  %v244 = vadd.f32 %v193, %v228
  %v245 = vadd.f32 %v194, %v229
  %v246 = vadd.f32 %v195, %v230
  %v247 = vadd.f32 %v196, %v231
  %v248 = vadd.f32 %v197, %v232
  %v249 = vadd.f32 %v198, %v233
  %v250 = vadd.f32 %v199, %v234
  %v251 = vadd.f32 %v200, %v235
  %v252 = vadd.f32 %v201, %v236
  %v253 = vld [vmem:[#allocation2] sm:$0xff]
  %v254 = vld [vmem:[#allocation2 + $0x8] sm:$0xff]
  %v255 = vld [vmem:[#allocation2 + $0x10] sm:$0xff]
  %v256 = vld [vmem:[#allocation2 + $0x18] sm:$0xff]
  %v257 = vld [vmem:[#allocation2 + $0x20] sm:$0xff]
  %v258 = vld [vmem:[#allocation2 + $0x28] sm:$0xff]
  %v259 = vld [vmem:[#allocation2 + $0x30] sm:$0xff]
  %v260 = vld [vmem:[#allocation2 + $0x38] sm:$0xff]
  %v261 = vld [vmem:[#allocation2 + $0x40] sm:$0xff]
  %v262 = vld [vmem:[#allocation2 + $0x48] sm:$0xff]
  %v263 = vld [vmem:[#allocation2 + $0x50] sm:$0xff]
  %v264 = vld [vmem:[#allocation2 + $0x58] sm:$0xff]
  %v265 = vld [vmem:[#allocation2 + $0x60] sm:$0xff]
  %v266 = vld [vmem:[#allocation2 + $0x68] sm:$0xff]
  %v267 = vld [vmem:[#allocation2 + $0x70] sm:$0xff]
  %v268 = vld [vmem:[#allocation2 + $0x78] sm:$0xff]
  %v269 = vld [vmem:[%s1] sm:$0xf]
  %v270 = vld [vmem:[%s1 + $0x4] sm:$0xf]
  %v271 = vld [vmem:[%s1 + $0x8] sm:$0xf]
  %v272 = vld [vmem:[%s1 + $0xc] sm:$0xf]
  %v273 = vld [vmem:[%s1 + $0x10] sm:$0xf]
  %v274 = vld [vmem:[%s1 + $0x14] sm:$0xf]
  %v275 = vld [vmem:[%s1 + $0x18] sm:$0xf]
  %v276 = vld [vmem:[%s1 + $0x1c] sm:$0xf]
  %v277 = vld [vmem:[%s1 + $0x20] sm:$0xf]
  %v278 = vld [vmem:[%s1 + $0x24] sm:$0xf]
  %v279 = vld [vmem:[%s1 + $0x28] sm:$0xf]
  %v280 = vld [vmem:[%s1 + $0x2c] sm:$0xf]
  %v281 = vld [vmem:[%s1 + $0x30] sm:$0xf]
  %v282 = vld [vmem:[%s1 + $0x34] sm:$0xf]
  %v283 = vld [vmem:[%s1 + $0x38] sm:$0xf]
  %v284 = vld [vmem:[%s1 + $0x3c] sm:$0xf]
  %v285 = vpack.c.bf16 %v238, %v237
  %v286 = vpack.c.bf16 %v240, %v239
  %v287 = vpack.c.bf16 %v242, %v241
  %v288 = vpack.c.bf16 %v244, %v243
  %v289 = vpack.c.bf16 %v246, %v245
  %v290 = vpack.c.bf16 %v248, %v247
  %v291 = vpack.c.bf16 %v250, %v249
  %v292 = vpack.c.bf16 %v252, %v251
  %v309 = vunpack.c.l.b16 %v269
  %v310 = vunpack.c.l.b16 %v270
  %v311 = vunpack.c.l.b16 %v271
  %v312 = vunpack.c.l.b16 %v272
  %v313 = vunpack.c.l.b16 %v273
  %v314 = vunpack.c.l.b16 %v274
  %v315 = vunpack.c.l.b16 %v275
  %v316 = vunpack.c.l.b16 %v276
  %v317 = vunpack.c.l.b16 %v277
  %v318 = vunpack.c.l.b16 %v278
  %v319 = vunpack.c.l.b16 %v279
  %v320 = vunpack.c.l.b16 %v280
  %v321 = vunpack.c.l.b16 %v281
  %v322 = vunpack.c.l.b16 %v282
  %v323 = vunpack.c.l.b16 %v283
  %v324 = vunpack.c.l.b16 %v284
  %v325 = vpack.c.b16 %v310, %v309
  %v326 = vpack.c.b16 %v312, %v311
  %v327 = vpack.c.b16 %v314, %v313
  %v328 = vpack.c.b16 %v316, %v315
  %v329 = vpack.c.b16 %v318, %v317
  %v330 = vpack.c.b16 %v320, %v319
  %v331 = vpack.c.b16 %v322, %v321
  %v332 = vpack.c.b16 %v324, %v323
  %341 = vmatpush.bf16.msra.mxu0 %v292
  %342 = vmatpush.bf16.msra.mxu0 %v291
  %343 = vmatpush.bf16.msra.mxu0 %v290
  %344 = vmatpush.bf16.msra.mxu0 %v289
  %345 = vmatpush.bf16.msra.mxu0 %v288
  %346 = vmatpush.bf16.msra.mxu0 %v287
  %347 = vmatpush.bf16.msra.mxu0 %v286
  %348 = vmatpush.bf16.msra.mxu0 %v285
  %349 = vmatmul.bf16.gmra.mxu0 %v325
  %v350 = vpop.f32.mrf.mxu0
  %v351 = vadd.f32 0.0, %v350
  %v352 = vpop.f32.mrf.mxu0
  %v353 = vadd.f32 0.0, %v352
  %354 = vmatmul.bf16.gmra.mxu0 %v326
  %v355 = vpop.f32.mrf.mxu0
  %v356 = vadd.f32 0.0, %v355
  %v357 = vpop.f32.mrf.mxu0
  %v358 = vadd.f32 0.0, %v357
  %359 = vmatmul.bf16.gmra.mxu0 %v327
  %v360 = vpop.f32.mrf.mxu0
  %v361 = vadd.f32 0.0, %v360
  %v362 = vpop.f32.mrf.mxu0
  %v363 = vadd.f32 0.0, %v362
  %364 = vmatmul.bf16.gmra.mxu0 %v328
  %v365 = vpop.f32.mrf.mxu0
  %v366 = vadd.f32 0.0, %v365
  %v367 = vpop.f32.mrf.mxu0
  %v368 = vadd.f32 0.0, %v367
  %369 = vmatmul.bf16.gmra.mxu0 %v329
  %v370 = vpop.f32.mrf.mxu0
  %v371 = vadd.f32 0.0, %v370
  %v372 = vpop.f32.mrf.mxu0
  %v373 = vadd.f32 0.0, %v372
  %374 = vmatmul.bf16.gmra.mxu0 %v330
  %v375 = vpop.f32.mrf.mxu0
  %v376 = vadd.f32 0.0, %v375
  %v377 = vpop.f32.mrf.mxu0
  %v378 = vadd.f32 0.0, %v377
  %379 = vmatmul.bf16.gmra.mxu0 %v331
  %v380 = vpop.f32.mrf.mxu0
  %v381 = vadd.f32 0.0, %v380
  %v382 = vpop.f32.mrf.mxu0
  %v383 = vadd.f32 0.0, %v382
  %384 = vmatmul.bf16.gmra.mxu0 %v332
  %v385 = vpop.f32.mrf.mxu0
  %v386 = vadd.f32 0.0, %v385
  %v387 = vpop.f32.mrf.mxu0
  %v388 = vadd.f32 0.0, %v387
  %389 = vdwg.mxu0
  %v390 = vadd.f32 %v253, %v351
  %v391 = vadd.f32 %v254, %v353
  %v392 = vadd.f32 %v255, %v356
  %v393 = vadd.f32 %v256, %v358
  %v394 = vadd.f32 %v257, %v361
  %v395 = vadd.f32 %v258, %v363
  %v396 = vadd.f32 %v259, %v366
  %v397 = vadd.f32 %v260, %v368
  %v398 = vadd.f32 %v261, %v371
  %v399 = vadd.f32 %v262, %v373
  %v400 = vadd.f32 %v263, %v376
  %v401 = vadd.f32 %v264, %v378
  %v402 = vadd.f32 %v265, %v381
  %v403 = vadd.f32 %v266, %v383
  %v404 = vadd.f32 %v267, %v386
  %v405 = vadd.f32 %v268, %v388
  %406 = vst [vmem:[#allocation2] sm:$0xff] %v390
  %407 = vst [vmem:[#allocation2 + $0x8] sm:$0xff] %v391
  %408 = vst [vmem:[#allocation2 + $0x10] sm:$0xff] %v392
  %409 = vst [vmem:[#allocation2 + $0x18] sm:$0xff] %v393
  %410 = vst [vmem:[#allocation2 + $0x20] sm:$0xff] %v394
  %411 = vst [vmem:[#allocation2 + $0x28] sm:$0xff] %v395
  %412 = vst [vmem:[#allocation2 + $0x30] sm:$0xff] %v396
  %413 = vst [vmem:[#allocation2 + $0x38] sm:$0xff] %v397
  %414 = vst [vmem:[#allocation2 + $0x40] sm:$0xff] %v398
  %415 = vst [vmem:[#allocation2 + $0x48] sm:$0xff] %v399
  %416 = vst [vmem:[#allocation2 + $0x50] sm:$0xff] %v400
  %417 = vst [vmem:[#allocation2 + $0x58] sm:$0xff] %v401
  %418 = vst [vmem:[#allocation2 + $0x60] sm:$0xff] %v402
  %419 = vst [vmem:[#allocation2 + $0x68] sm:$0xff] %v403
  %420 = vst [vmem:[#allocation2 + $0x70] sm:$0xff] %v404
  %421 = vst [vmem:[#allocation2 + $0x78] sm:$0xff] %v405
  // Predicated region
  $region38: #{encoder2_forward.1} parent=0 // pred_check
    %p422 = pneg %p29
  $region39: #{encoder2_forward.1} parent=0 // pred_check_branch
    %424 = sbr.rel (%p422) target = $region41
  $region40: #{encoder2_forward.1} parent=0 // pred_region
    %v425 = vld [vmem:[#allocation2] sm:$0xff]
    %v426 = vld [vmem:[#allocation2 + $0x8] sm:$0xff]
    %v427 = vld [vmem:[#allocation2 + $0x10] sm:$0xff]
    %v428 = vld [vmem:[#allocation2 + $0x18] sm:$0xff]
    %v429 = vld [vmem:[#allocation2 + $0x20] sm:$0xff]
    %v430 = vld [vmem:[#allocation2 + $0x28] sm:$0xff]
    %v431 = vld [vmem:[#allocation2 + $0x30] sm:$0xff]
    %v432 = vld [vmem:[#allocation2 + $0x38] sm:$0xff]
    %v433 = vld [vmem:[#allocation2 + $0x40] sm:$0xff]
    %v434 = vld [vmem:[#allocation2 + $0x48] sm:$0xff]
    %v435 = vld [vmem:[#allocation2 + $0x50] sm:$0xff]
    %v436 = vld [vmem:[#allocation2 + $0x58] sm:$0xff]
    %v437 = vld [vmem:[#allocation2 + $0x60] sm:$0xff]
    %v438 = vld [vmem:[#allocation2 + $0x68] sm:$0xff]
    %v439 = vld [vmem:[#allocation2 + $0x70] sm:$0xff]
    %v440 = vld [vmem:[#allocation2 + $0x78] sm:$0xff]
    %v441 = vld [vmem:[%s5] sm:$0xff]
    %v442 = vld [vmem:[%s5 + $0x8] sm:$0xff]
    %v443 = vld [vmem:[%s5 + $0x10] sm:$0xff]
    %v444 = vld [vmem:[%s5 + $0x18] sm:$0xff]
    %v445 = vld [vmem:[%s5 + $0x20] sm:$0xff]
    %v446 = vld [vmem:[%s5 + $0x28] sm:$0xff]
    %v447 = vld [vmem:[%s5 + $0x30] sm:$0xff]
    %v448 = vld [vmem:[%s5 + $0x38] sm:$0xff]
    %v449 = vld [vmem:[%s5 + $0x40] sm:$0xff]
    %v450 = vld [vmem:[%s5 + $0x48] sm:$0xff]
    %v451 = vld [vmem:[%s5 + $0x50] sm:$0xff]
    %v452 = vld [vmem:[%s5 + $0x58] sm:$0xff]
    %v453 = vld [vmem:[%s5 + $0x60] sm:$0xff]
    %v454 = vld [vmem:[%s5 + $0x68] sm:$0xff]
    %v455 = vld [vmem:[%s5 + $0x70] sm:$0xff]
    %v456 = vld [vmem:[%s5 + $0x78] sm:$0xff]
    %v457 = vld [vmem:[%s6] sm:$0x1]
    %v459 = vperm.slane %v457, 0
    %461 = vmatpush.msra.mxu0 %v456
    %462 = vmatpush.msra.mxu0 %v455
    %463 = vmatpush.msra.mxu0 %v454
    %464 = vmatpush.msra.mxu0 %v453
    %465 = vmatpush.msra.mxu0 %v452
    %466 = vmatpush.msra.mxu0 %v451
    %467 = vmatpush.msra.mxu0 %v450
    %468 = vmatpush.msra.mxu0 %v449
    %469 = vmatpush.msra.mxu0 %v448
    %470 = vmatpush.msra.mxu0 %v447
    %471 = vmatpush.msra.mxu0 %v446
    %472 = vmatpush.msra.mxu0 %v445
    %473 = vmatpush.msra.mxu0 %v444
    %474 = vmatpush.msra.mxu0 %v443
    %475 = vmatpush.msra.mxu0 %v442
    %476 = vmatpush.msra.mxu0 %v441
    %477 = vmatmul.f32.gmra.mxu0 %v425
    %v478 = vpop.f32.mrf.mxu0
    %v479 = vadd.f32 %v459, %v478
    %480 = vmatmul.f32.gmra.mxu0 %v426
    %v481 = vpop.f32.mrf.mxu0
    %v482 = vadd.f32 %v459, %v481
    %483 = vmatmul.f32.gmra.mxu0 %v427
    %v484 = vpop.f32.mrf.mxu0
    %v485 = vadd.f32 %v459, %v484
    %486 = vmatmul.f32.gmra.mxu0 %v428
    %v487 = vpop.f32.mrf.mxu0
    %v488 = vadd.f32 %v459, %v487
    %489 = vmatmul.f32.gmra.mxu0 %v429
    %v490 = vpop.f32.mrf.mxu0
    %v491 = vadd.f32 %v459, %v490
    %492 = vmatmul.f32.gmra.mxu0 %v430
    %v493 = vpop.f32.mrf.mxu0
    %v494 = vadd.f32 %v459, %v493
    %495 = vmatmul.f32.gmra.mxu0 %v431
    %v496 = vpop.f32.mrf.mxu0
    %v497 = vadd.f32 %v459, %v496
    %498 = vmatmul.f32.gmra.mxu0 %v432
    %v499 = vpop.f32.mrf.mxu0
    %v500 = vadd.f32 %v459, %v499
    %501 = vmatmul.f32.gmra.mxu0 %v433
    %v502 = vpop.f32.mrf.mxu0
    %v503 = vadd.f32 %v459, %v502
    %504 = vmatmul.f32.gmra.mxu0 %v434
    %v505 = vpop.f32.mrf.mxu0
    %v506 = vadd.f32 %v459, %v505
    %507 = vmatmul.f32.gmra.mxu0 %v435
    %v508 = vpop.f32.mrf.mxu0
    %v509 = vadd.f32 %v459, %v508
    %510 = vmatmul.f32.gmra.mxu0 %v436
    %v511 = vpop.f32.mrf.mxu0
    %v512 = vadd.f32 %v459, %v511
    %513 = vmatmul.f32.gmra.mxu0 %v437
    %v514 = vpop.f32.mrf.mxu0
    %v515 = vadd.f32 %v459, %v514
    %516 = vmatmul.f32.gmra.mxu0 %v438
    %v517 = vpop.f32.mrf.mxu0
    %v518 = vadd.f32 %v459, %v517
    %519 = vmatmul.f32.gmra.mxu0 %v439
    %v520 = vpop.f32.mrf.mxu0
    %v521 = vadd.f32 %v459, %v520
    %522 = vmatmul.f32.gmra.mxu0 %v440
    %v523 = vpop.f32.mrf.mxu0
    %v524 = vadd.f32 %v459, %v523
    %525 = vdwg.mxu0
    %v526 = vld [vmem:[%s7] sm:$0x1]
    %v527 = vmax.f32 %v479, 0.0
    %v528 = vmax.f32 %v482, 0.0
    %v529 = vmax.f32 %v485, 0.0
    %v530 = vmax.f32 %v488, 0.0
    %v531 = vmax.f32 %v491, 0.0
    %v532 = vmax.f32 %v494, 0.0
    %v533 = vmax.f32 %v497, 0.0
    %v534 = vmax.f32 %v500, 0.0
    %v535 = vmax.f32 %v503, 0.0
    %v536 = vmax.f32 %v506, 0.0
    %v537 = vmax.f32 %v509, 0.0
    %v538 = vmax.f32 %v512, 0.0
    %v539 = vmax.f32 %v515, 0.0
    %v540 = vmax.f32 %v518, 0.0
    %v541 = vmax.f32 %v521, 0.0
    %v542 = vmax.f32 %v524, 0.0
    %v543 = vmin.f32 %v479, 0.0
    %v544 = vmin.f32 %v482, 0.0
    %v545 = vmin.f32 %v485, 0.0
    %v546 = vmin.f32 %v488, 0.0
    %v547 = vmin.f32 %v491, 0.0
    %v548 = vmin.f32 %v494, 0.0
    %v549 = vmin.f32 %v497, 0.0
    %v550 = vmin.f32 %v500, 0.0
    %v551 = vmin.f32 %v503, 0.0
    %v552 = vmin.f32 %v506, 0.0
    %v553 = vmin.f32 %v509, 0.0
    %v554 = vmin.f32 %v512, 0.0
    %v555 = vmin.f32 %v515, 0.0
    %v556 = vmin.f32 %v518, 0.0
    %v557 = vmin.f32 %v521, 0.0
    %v558 = vmin.f32 %v524, 0.0
    %v560 = vperm.slane %v526, 0
    %v562 = vmul.f32 %v560, %v543
    %v563 = vmul.f32 %v560, %v544
    %v564 = vmul.f32 %v560, %v545
    %v565 = vmul.f32 %v560, %v546
    %v566 = vmul.f32 %v560, %v547
    %v567 = vmul.f32 %v560, %v548
    %v568 = vmul.f32 %v560, %v549
    %v569 = vmul.f32 %v560, %v550
    %v570 = vmul.f32 %v560, %v551
    %v571 = vmul.f32 %v560, %v552
    %v572 = vmul.f32 %v560, %v553
    %v573 = vmul.f32 %v560, %v554
    %v574 = vmul.f32 %v560, %v555
    %v575 = vmul.f32 %v560, %v556
    %v576 = vmul.f32 %v560, %v557
    %v577 = vmul.f32 %v560, %v558
    %v578 = vadd.f32 %v527, %v562
    %v579 = vadd.f32 %v528, %v563
    %v580 = vadd.f32 %v529, %v564
    %v581 = vadd.f32 %v530, %v565
    %v582 = vadd.f32 %v531, %v566
    %v583 = vadd.f32 %v532, %v567
    %v584 = vadd.f32 %v533, %v568
    %v585 = vadd.f32 %v534, %v569
    %v586 = vadd.f32 %v535, %v570
    %v587 = vadd.f32 %v536, %v571
    %v588 = vadd.f32 %v537, %v572
    %v589 = vadd.f32 %v538, %v573
    %v590 = vadd.f32 %v539, %v574
    %v591 = vadd.f32 %v540, %v575
    %v592 = vadd.f32 %v541, %v576
    %v593 = vadd.f32 %v542, %v577
    %594 = vst [vmem:[%s8] sm:$0xff] %v578
    %595 = vst [vmem:[%s8 + $0x8] sm:$0xff] %v579
    %596 = vst [vmem:[%s8 + $0x10] sm:$0xff] %v580
    %597 = vst [vmem:[%s8 + $0x18] sm:$0xff] %v581
    %598 = vst [vmem:[%s8 + $0x20] sm:$0xff] %v582
    %599 = vst [vmem:[%s8 + $0x28] sm:$0xff] %v583
    %600 = vst [vmem:[%s8 + $0x30] sm:$0xff] %v584
    %601 = vst [vmem:[%s8 + $0x38] sm:$0xff] %v585
    %602 = vst [vmem:[%s8 + $0x40] sm:$0xff] %v586
    %603 = vst [vmem:[%s8 + $0x48] sm:$0xff] %v587
    %604 = vst [vmem:[%s8 + $0x50] sm:$0xff] %v588
    %605 = vst [vmem:[%s8 + $0x58] sm:$0xff] %v589
    %606 = vst [vmem:[%s8 + $0x60] sm:$0xff] %v590
    %607 = vst [vmem:[%s8 + $0x68] sm:$0xff] %v591
    %608 = vst [vmem:[%s8 + $0x70] sm:$0xff] %v592
    %609 = vst [vmem:[%s8 + $0x78] sm:$0xff] %v593
  $region41: #{encoder2_forward.1} parent=0 // pred_fallthru
    _
  // Predicated region
  $region42: #{encoder2_forward.1} parent=0 // pred_check
    _
  $region43: #{encoder2_forward.1} parent=0 // pred_check_branch
    %611 = sbr.rel (0) target = $region45
  $region44: #{encoder2_forward.1} parent=0 // pred_region
    _
  $region45: #{encoder2_forward.1} parent=0 // pred_fallthru
    _
  // Predicated region
  $region46: #{encoder2_forward.1} parent=0 // pred_check
    _
  $region47: #{encoder2_forward.1} parent=0 // pred_check_branch
    %613 = sbr.rel (0) target = $region49
  $region48: #{encoder2_forward.1} parent=0 // pred_region
    _
  $region49: #{encoder2_forward.1} parent=0 // pred_fallthru
    _

</llo_original>
